<compile_context>
chip_gen: v5e
topology: v5e:2x2
jax: 0.10.0
libtpu: 0.0.40
codegen_flags: <defaults>
</compile_context>

<pallas_src>
import functools
import math

import jax
import jax.numpy as jnp
from jax.experimental import pallas as pl
from jax.experimental.pallas import tpu as pltpu

_LANE = 128
_SUBLANE = 8
_TARGET_TILE_BYTES = 4 << 20      # ~4 MiB per pipeline buffer
_VMEM_LIMIT_BYTES = 32 << 20      # 2 in + 2 out buffers of 4 MiB fit easily
_SMALL_FALLBACK_BYTES = 1 << 20   # below this, one fused XLA op beats a kernel


def _drop_path_kernel(keep_ref, x_ref, o_ref, *, inv_keep_prob: float):
    """Processes one (1, tile_rows, 128) block of one sample."""
    b = pl.program_id(0)
    keep = keep_ref[b]                       # int32 0/1 per sample, from SMEM

    @pl.when(keep == 0)
    def _():
        # Dropped sample: write zeros, never touch x_ref (its DMA was elided).
        o_ref[...] = jnp.zeros_like(o_ref)

    @pl.when(keep != 0)
    def _():
        # Kept sample: scale by 1/keep_prob in f32 (free; kernel is mem-bound).
        o_ref[...] = (x_ref[...].astype(jnp.float32) * inv_keep_prob).astype(
            o_ref.dtype)


def drop_path(x, drop_prob: float = 0.0, *, training: bool = False, key=None,
              donate: bool = False,
              small_fallback_bytes: int = _SMALL_FALLBACK_BYTES):
    """Pallas implementation of DropPath.forward for x of shape (B, ...)."""
    if drop_prob == 0.0 or not training:
        return x
    if key is None:
        raise ValueError(
            "drop_path with drop_prob > 0 and training=True requires an "
            "explicit PRNG key (torch.rand draws fresh randomness per call).")

    keep_prob = 1.0 - float(drop_prob)
    orig_shape = x.shape
    B = int(orig_shape[0])
    n = int(math.prod(orig_shape[1:])) if len(orig_shape) > 1 else 1
    itemsize = jnp.dtype(x.dtype).itemsize

    # Per-sample keep flags (0/1), statistically equivalent to
    # floor(keep_prob + U[0,1)); scalar-prefetched into SMEM for the kernel.
    keep = jax.random.bernoulli(key, p=keep_prob, shape=(B,)).astype(jnp.int32)

    # Tiny activations: launch/reshape/per-step overhead dominates; let XLA
    # fuse a single elementwise op instead.
    if B * n * itemsize < small_fallback_bytes:
        mask = keep.astype(x.dtype).reshape((B,) + (1,) * (x.ndim - 1))
        return x * (mask / jnp.asarray(keep_prob, dtype=x.dtype))

    # Lane-dense layout: flatten non-batch dims to (B, rows, 128).  Only the
    # sub-128 remainder is padded (<=127 elems/sample); for lane-aligned n this
    # is a pure (bitcast) reshape with no extra HBM pass.
    rows = -(-n // _LANE)                  # ceil(n / 128)
    n_pad = rows * _LANE
    x_flat = x.reshape(B, n)
    if n_pad != n:
        x_flat = jnp.pad(x_flat, ((0, 0), (0, n_pad - n)))
    x3 = x_flat.reshape(B, rows, _LANE)

    # Row-tile sizing: biggest multiple-of-8 tile under the byte target; the
    # ragged last tile (rows % tile_rows != 0) is masked by Pallas itself.
    max_tile_rows = max(
        _SUBLANE,
        ((_TARGET_TILE_BYTES // (_LANE * itemsize)) // _SUBLANE) * _SUBLANE)
    if rows <= max_tile_rows:
        tile_rows = rows                   # full extent (allowed even if not %8)
        n_row_tiles = 1
    else:
        tile_rows = max_tile_rows
        n_row_tiles = -(-rows // tile_rows)

    kernel = functools.partial(_drop_path_kernel, inv_keep_prob=1.0 / keep_prob)

    # Dropped samples pin the input block index to (0,0,0): consecutive grid
    # steps then revisit the same block and Pallas skips the input DMA.  The
    # keep==0 branch never reads x_ref, so the block contents do not matter.
    def in_index_map(b, r, keep_ref):
        k = keep_ref[b]
        return (b * k, r * k, 0)

    def out_index_map(b, r, keep_ref):
        return (b, r, 0)

    out = pl.pallas_call(
        kernel,
        out_shape=jax.ShapeDtypeStruct((B, rows, _LANE), x.dtype),
        grid_spec=pltpu.PrefetchScalarGridSpec(
            num_scalar_prefetch=1,
            grid=(B, n_row_tiles),
            in_specs=[pl.BlockSpec((1, tile_rows, _LANE), in_index_map)],
            out_specs=pl.BlockSpec((1, tile_rows, _LANE), out_index_map),
        ),
        compiler_params=pltpu.CompilerParams(
            # All grid steps are independent (mask known up front).
            dimension_semantics=("parallel", "parallel"),
            vmem_limit_bytes=_VMEM_LIMIT_BYTES),
        cost_estimate=pl.CostEstimate(
            flops=B * rows * _LANE,
            transcendentals=0,
            bytes_accessed=2 * B * rows * _LANE * itemsize),
        # Alias x3 with the output only when the caller can donate x; otherwise
        # XLA would insert a defensive copy and undo the traffic savings.
        input_output_aliases=({1: 0} if donate else {}),
    )(keep, x3)

    out = out.reshape(B, n_pad)
    if n_pad != n:
        out = out[:, :n]
    return out.reshape(orig_shape)


class DropPath:
    """Mirror of the PyTorch module (training flag set on the instance)."""

    def __init__(self, drop_prob=None, *, key=None):
        self.drop_prob = drop_prob if drop_prob is not None else 0.0
        self.training = True
        self._key = key if key is not None else jax.random.PRNGKey(0)
        self._calls = 0

    def __call__(self, x, *, key=None, **kwargs):
        if key is None:
            # Fresh randomness per call, like torch.rand.
            key = jax.random.fold_in(self._key, self._calls)
            self._calls += 1
        return drop_path(x, self.drop_prob, training=self.training, key=key,
                         **kwargs)


def _check_sample_semantics(x, y, keep_prob):
    ok = True
    for b in range(x.shape[0]):
        yb = y[b]
        zeroed = bool(jnp.all(yb == 0.0))
        scaled = bool(jnp.allclose(yb, x[b] / keep_prob, atol=1e-5, rtol=1e-5))
        ok = ok and (zeroed or scaled)
    return ok


if __name__ == "__main__":
    root_key = jax.random.PRNGKey(0)
    kx1, kx2, kd1, kd2 = jax.random.split(root_key, 4)

    drop_prob = 0.25
    keep_prob = 1.0 - drop_prob
    ok = True

    # 1) Lane-aligned shape (n = 64*32 = 2048 = 16*128): no pad, no slice.
    x1 = jax.random.normal(kx1, (2, 64, 32), dtype=jnp.float32)
    mod = DropPath(drop_prob=drop_prob, key=kd1)
    mod.training = True
    # small_fallback_bytes=0 forces the Pallas path even at demo sizes.
    y1 = jax.block_until_ready(mod(x1, small_fallback_bytes=0))
    ok = ok and _check_sample_semantics(x1, y1, keep_prob)

    # 2) Non-lane-aligned shape (n = 7*36 = 252): exercises the remainder
    #    pad / slice path and a block equal to the full (ragged) row extent.
    x2 = jax.random.normal(kx2, (2, 7, 36), dtype=jnp.float32)
    y2 = jax.block_until_ready(
        drop_path(x2, drop_prob, training=True, key=kd2,
                  small_fallback_bytes=0))
    ok = ok and _check_sample_semantics(x2, y2, keep_prob)

    # 3) Eval / drop_prob == 0 path: identity.
    mod.training = False
    y_eval = jax.block_until_ready(mod(x1))
    ok = ok and bool(jnp.array_equal(y_eval, x1))

    if ok:
        print("KERNEL_OK")
    else:
        print("KERNEL_MISMATCH")
</pallas_src>

<mosaic_0001>
module attributes {stable_mosaic.version = 11 : i64} {
  func.func @_drop_path_kernel(%arg0: i32, %arg1: i32, %arg2: memref<2xi32, #tpu.memory_space<smem>>, %arg3: memref<1x16x128xf32, #tpu.memory_space<vmem>>, %arg4: memref<1x16x128xf32, #tpu.memory_space<vmem>>) attributes {dimension_semantics = [#tpu.dimension_semantics<parallel>, #tpu.dimension_semantics<parallel>], iteration_bounds = array<i64: 2, 1>, scalar_prefetch = 1 : i64, scratch_operands = 0 : i64, tpu.core_type = #tpu.core_type<tc>, window_params = [{transform_indices = @transform_0, window_bounds = array<i64: 1, 16, 128>}, {transform_indices = @transform_1, window_bounds = array<i64: 1, 16, 128>}]} {
    %0 = arith.index_cast %arg0 : i32 to index
    %1 = memref.load %arg2[%0] : memref<2xi32, #tpu.memory_space<smem>>
    %c0_i32 = arith.constant 0 : i32
    %2 = arith.cmpi eq, %1, %c0_i32 : i32
    %3 = arith.extui %2 : i1 to i32
    %c0_i32_0 = arith.constant 0 : i32
    %4 = arith.cmpi ne, %3, %c0_i32_0 : i32
    scf.if %4 {
      %cst = arith.constant 0.000000e+00 : f32
      %8 = vector.broadcast %cst : f32 to vector<1x16x128xf32>
      %c0 = arith.constant 0 : index
      %c0_3 = arith.constant 0 : index
      %c0_4 = arith.constant 0 : index
      %9 = vector.load %arg4[%c0, %c0_3, %c0_4] : memref<1x16x128xf32, #tpu.memory_space<vmem>>, vector<1x16x128xf32>
      tpu.vector_store %arg4[%c0, %c0_3, %c0_4], %8 {strides = array<i32>} : memref<1x16x128xf32, #tpu.memory_space<vmem>>, vector<1x16x128xf32>,
    } else {
    }
    %c0_i32_1 = arith.constant 0 : i32
    %5 = arith.cmpi ne, %1, %c0_i32_1 : i32
    %6 = arith.extui %5 : i1 to i32
    %c0_i32_2 = arith.constant 0 : i32
    %7 = arith.cmpi ne, %6, %c0_i32_2 : i32
    scf.if %7 {
      %c0 = arith.constant 0 : index
      %c0_3 = arith.constant 0 : index
      %c0_4 = arith.constant 0 : index
      %8 = vector.load %arg3[%c0, %c0_3, %c0_4] : memref<1x16x128xf32, #tpu.memory_space<vmem>>, vector<1x16x128xf32>
      %cst = arith.constant 1.33333337 : f32
      %9 = vector.broadcast %cst : f32 to vector<1x16x128xf32>
      %10 = arith.mulf %8, %9 : vector<1x16x128xf32>
      %c0_5 = arith.constant 0 : index
      %c0_6 = arith.constant 0 : index
      %c0_7 = arith.constant 0 : index
      %11 = vector.load %arg4[%c0_5, %c0_6, %c0_7] : memref<1x16x128xf32, #tpu.memory_space<vmem>>, vector<1x16x128xf32>
      tpu.vector_store %arg4[%c0_5, %c0_6, %c0_7], %10 {strides = array<i32>} : memref<1x16x128xf32, #tpu.memory_space<vmem>>, vector<1x16x128xf32>,
    } else {
    }
    return
  }
  func.func @transform_0(%arg0: i32, %arg1: i32, %arg2: memref<2xi32, #tpu.memory_space<smem>>) -> (i32, i32, i32) {
    %0 = arith.index_cast %arg0 : i32 to index
    %1 = memref.load %arg2[%0] : memref<2xi32, #tpu.memory_space<smem>>
    %2 = arith.muli %arg0, %1 : i32
    %3 = arith.muli %arg1, %1 : i32
    %c0_i32 = arith.constant 0 : i32
    %c0_i32_0 = arith.constant 0 : i32
    return %2, %3, %c0_i32 : i32, i32, i32
  }
  func.func @transform_1(%arg0: i32, %arg1: i32, %arg2: memref<2xi32, #tpu.memory_space<smem>>) -> (i32, i32, i32) {
    %c0_i32 = arith.constant 0 : i32
    %c0_i32_0 = arith.constant 0 : i32
    return %arg0, %arg1, %c0_i32 : i32, i32, i32
  }
}

</mosaic_0001>

<llo_original>
// kernel: tpu_custom_call.1
$region0: #{tpu_custom_call.1}
  #allocation0 [shape = 'u32[]', space=smem, size = 0x4, offset = 0x4, fixed_abs, tag = 'smem constant byte address 0x4 - core index']
  #allocation1 [shape = 'u32[72,128]{1,0:T(1,128)}', space=vmem, size = 0x9000, scoped, tag = 'internal scratch']
  #allocation2 [shape = 's32[1]{0}', space=sflag, size = 0x4, scoped, tag = 'scoped memory for tpu_custom_call.1']
  #allocation3 [shape = 'u8[512]{0}', space=smem, size = 0x200, scoped, tag = 'prefetched SMEM operand 0']
  %s0 = inlined_call_operand.hbm [shape: s32[2], index: 0, kind: input, shape index: {}]
  %s1 = inlined_call_operand.hbm [shape: f32[2,16,128], index: 1, kind: input, shape index: {}]
  %s2 = inlined_call_operand.hbm [shape: f32[2,16,128], index: 2, kind: output, shape index: {}]
  %s3 = sld [smem:[#allocation0]]
  $region49: #{tpu_custom_call.1} parent=0
    _
  %s5 = ssub.s32 1, %s3
  %s6 = scalar_select 0, %s5, %s3
  %s8 = sshll.u32 %s0, 4
  %s9 = int_to_ptr.hbm [resolvable:$true] %s8
  %11 = dma.hbm_to_smem %s9, 16, [#allocation3], [#allocation2]
  %13 = dma.done [#allocation2], 16
  %14 = sfence
  $region1: #{tpu_custom_call.1} parent=0
    #allocation4 [shape = 'u8[16384]{0}', space=vmem, size = 0x4000, scoped, tag = 'input window, operand 1']
    #allocation5 [shape = 's32[2]{0}', space=sflag, size = 0x8, scoped, tag = 'scoped memory for tpu_custom_call.1']
    #allocation6 [shape = 's32[2]{0}', space=sflag, size = 0x8, scoped, tag = 'scoped memory for tpu_custom_call.1']
    #allocation7 [shape = 'u8[16384]{0}', space=vmem, size = 0x4000, scoped, tag = 'output window, operand 0']
    %15 = vsyncpa [#allocation5], 0
    %s16 = scalar_lea.sflag [#allocation5], 1
    %17 = vsyncpa %s16, 0
    %18 = vsyncpa [#allocation6], 0
    %s19 = scalar_lea.sflag [#allocation6], 1
    %20 = vsyncpa %s19, 0
    loop: start=0, step=1, limit=4
    $region2: #{tpu_custom_call.1} parent=1 // loop_pre_header
      _
    $region3: #{tpu_custom_call.1} parent=1 // loop_header
      %s22 = sphi 0, %s26
      %p23 = scmp.ge.s32.totalorder %s22, 4
      %s29 = sphi 0, %s41
      %s30 = sphi 0, %s37
      %s31 = sphi 0, %s29
      %s32 = sphi 0, %s30
      %s33 = sphi 0, %s31
      %s34 = sphi 0, %s32
      %s52 = sphi 0, %s54
      %s55 = sphi 0, %s52
      %s56 = sphi 0, %s55
      %s72 = sphi 0, %s56
      %s80 = sphi 0, %s82
      %s83 = sphi 0, %s80
      %s84 = sphi 0, %s83
      %s100 = sphi 0, %s84
    $region4: #{tpu_custom_call.1} parent=1 // loop_header_branch
      %25 = sbr.rel (%p23) target = $region8
    $region5: #{tpu_custom_call.1} parent=1 // loop_body
      %s27 = ssub.s32 %s22, 1
      %s28 = ssub.s32 %s22, 2
      %s35 = sadd.s32 1, %s30
      %p36 = scmp.ge.s32.totalorder %s35, 1
      %s37 = scalar_select %p36, 0, %s35
      %s38 = sadd.s32 1, %s29
      %s39 = scalar_select %p36, %s38, %s29
      %p40 = scmp.ge.s32.totalorder %s39, 2
      %s41 = scalar_select %p40, 0, %s39
      %s42 = sld [smem:[#allocation3 + %s29]]
      %s43 = smul.u32 %s29, %s42
      %s44 = smul.u32 %s30, %s42
      %s45 = sld [smem:[#allocation3 + %s41]]
      %s46 = smul.u32 %s41, %s45
      %s47 = smul.u32 %s37, %s45
      %s48 = ssub.s32 %s43, %s46
      %s49 = ssub.s32 %s44, %s47
      %s50 = sor.u32 %s48, %s49
      %p51 = scmp.eq.s32.totalorder %s50, 0
      %s53 = sadd.s32 %s52, 1
      %s54 = scalar_select %p51, %s52, %s53
      %p57 = pneg %p51
      %p58 = scmp.eq.s32.totalorder %s22, 1
      %p59 = por %p57, %p58
      %p60 = scmp.ne.s32.totalorder %s52, %s55
      %p61 = scmp.eq.s32.totalorder %s22, 0
      %p62 = por %p60, %p61
      %p63 = scmp.ne.s32.totalorder %s52, %s55
      %p64 = scmp.eq.s32.totalorder %s27, 1
      %p65 = por %p63, %p64
      %p66 = scmp.ne.s32.totalorder %s55, %s56
      %p67 = scmp.eq.s32.totalorder %s27, 0
      %p68 = por %p66, %p67
      %p69 = scmp.ne.s32.totalorder %s55, %s56
      %p70 = scmp.eq.s32.totalorder %s28, 1
      %p71 = por %p69, %p70
      %p73 = scmp.ne.s32.totalorder %s56, %s72
      %p74 = scmp.eq.s32.totalorder %s28, 0
      %p75 = por %p73, %p74
      %s76 = ssub.s32 %s29, %s41
      %s77 = ssub.s32 %s30, %s37
      %s78 = sor.u32 %s76, %s77
      %p79 = scmp.eq.s32.totalorder %s78, 0
      %s81 = sadd.s32 %s80, 1
      %s82 = scalar_select %p79, %s80, %s81
      %p85 = pneg %p79
      %p86 = scmp.eq.s32.totalorder %s22, 1
      %p87 = por %p85, %p86
      %p88 = scmp.ne.s32.totalorder %s80, %s83
      %p89 = scmp.eq.s32.totalorder %s22, 0
      %p90 = por %p88, %p89
      %p91 = scmp.ne.s32.totalorder %s80, %s83
      %p92 = scmp.eq.s32.totalorder %s27, 1
      %p93 = por %p91, %p92
      %p94 = scmp.ne.s32.totalorder %s83, %s84
      %p95 = scmp.eq.s32.totalorder %s27, 0
      %p96 = por %p94, %p95
      %p97 = scmp.ne.s32.totalorder %s83, %s84
      %p98 = scmp.eq.s32.totalorder %s28, 1
      %p99 = por %p97, %p98
      %p101 = scmp.ne.s32.totalorder %s84, %s100
      %p102 = scmp.eq.s32.totalorder %s28, 0
      %p103 = por %p101, %p102
      %p104 = scmp.le.s32.totalorder 1, %s22
      %p105 = scmp.lt.s32.totalorder %s22, 3
      %p106 = pnand %p104, %p105
      %p107 = pneg %p106
      // Predicated region
      $region9: #{tpu_custom_call.1} parent=5 // pred_check
        _
      $region10: #{tpu_custom_call.1} parent=5 // pred_check_branch
        %109 = sbr.rel (%p106) target = $region12
      $region11: #{tpu_custom_call.1} parent=5 // pred_region
        %s110 = ssub.s32 %s22, 1
      $region12: #{tpu_custom_call.1} parent=5 // pred_fallthru
        _
      %p111 = scmp.lt.s32.totalorder %s22, 2
      // Predicated region
      $region13: #{tpu_custom_call.1} parent=5 // pred_check
        %p112 = pneg %p111
      $region14: #{tpu_custom_call.1} parent=5 // pred_check_branch
        %114 = sbr.rel (%p112) target = $region16
      $region15: #{tpu_custom_call.1} parent=5 // pred_region
        // Predicated region
        $region17: #{tpu_custom_call.1} parent=15 // pred_check
          %p115 = pneg %p62
        $region18: #{tpu_custom_call.1} parent=15 // pred_check_branch
          %117 = sbr.rel (%p115) target = $region20
        $region19: #{tpu_custom_call.1} parent=15 // pred_region
          %s118 = sand.u32 %s52, 1
          %s119 = scalar_lea.sflag [#allocation5], %s118
          %s120 = sand.u32 %s52, 1
          %s121 = smul.addr %s120, 16
          %s122 = scalar_lea.vmem [#allocation4], %s121
          %s123 = sld [smem:[#allocation3 + %s29]]
          %s124 = smul.u32 %s29, %s123
          %s125 = smul.u32 %s30, %s123
          %s126 = smul.u32 2, %s125
          %128 = vsyncadd %s119, 0
          %s129 = smul.addr %s124, 2
          %s130 = sadd.s32 %s126, %s129
          %s131 = smul.addr %s130, 8
          %s132 = scalar_lea.hbm %s1, %s131
          %s133 = sshll.u32 %s132, 4
          %s134 = int_to_ptr.hbm [resolvable:$true] %s133
          %s135 = sshll.u32 %s122, 4
          %s136 = int_to_ptr.vmem [resolvable:$true] %s135
          %141 = dma.hbm_to_vmem [thread:$0]  %s134, 256, %s136, %s119, 128, 128, 8
        $region20: #{tpu_custom_call.1} parent=15 // pred_fallthru
          _
      $region16: #{tpu_custom_call.1} parent=5 // pred_fallthru
        _
      %p142 = scmp.le.s32.totalorder 1, %s22
      %p143 = scmp.lt.s32.totalorder %s22, 3
      %p144 = pnand %p142, %p143
      %p145 = pneg %p144
      // Predicated region
      $region21: #{tpu_custom_call.1} parent=5 // pred_check
        _
      $region22: #{tpu_custom_call.1} parent=5 // pred_check_branch
        %147 = sbr.rel (%p144) target = $region24
      $region23: #{tpu_custom_call.1} parent=5 // pred_region
        %s148 = ssub.s32 %s22, 1
        %s149 = sand.u32 %s55, 1
        %s150 = scalar_lea.sflag [#allocation5], %s149
        %s151 = sand.u32 %s55, 1
        %s152 = smul.addr %s151, 16
        %s153 = scalar_lea.vmem [#allocation4], %s152
        // Predicated region
        $region25: #{tpu_custom_call.1} parent=23 // pred_check
          %p154 = pneg %p68
        $region26: #{tpu_custom_call.1} parent=23 // pred_check_branch
          %156 = sbr.rel (%p154) target = $region28
        $region27: #{tpu_custom_call.1} parent=23 // pred_region
          %158 = dma.done %s150, 256
        $region28: #{tpu_custom_call.1} parent=23 // pred_fallthru
          _
        %s159 = sand.u32 %s55, 1
        %s160 = scalar_lea.sflag [#allocation5], %s159
        %s161 = sand.u32 %s55, 1
        %s162 = smul.addr %s161, 16
        %s163 = scalar_lea.vmem [#allocation4], %s162
        %p164 = pneg %p68
        %p165 = pneg %p65
        %p166 = pneg %p96
        %p167 = pneg %p93
        %s168 = sand.u32 %s83, 1
        %s169 = scalar_lea.sflag [#allocation6], %s168
        %s170 = sand.u32 %s83, 1
        %s171 = smul.addr %s170, 16
        %s172 = scalar_lea.vmem [#allocation7], %s171
        %s173 = sld [smem:[#allocation3 + %s31]]
        %s174 = smul.u32 %s31, %s173
        %s175 = smul.u32 %s32, %s173
        %s176 = smul.u32 2, %s175
        %s177 = smul.u32 2, %s32
        %s178 = sld [smem:[#allocation3 + %s31]]
        %p179 = scmp.eq.s32.totalorder %s178, 0
        // Predicated region
        $region29: #{tpu_custom_call.1} parent=23 // pred_check
          %p180 = pneg %p179
        $region30: #{tpu_custom_call.1} parent=23 // pred_check_branch
          %182 = sbr.rel (%p180) target = $region32
        $region31: #{tpu_custom_call.1} parent=23 // pred_region
          %183 = vst [vmem:[%s172] sm:$0xff] 0.0
          %184 = vst [vmem:[%s172 + $0x8] sm:$0xff] 0.0
        $region32: #{tpu_custom_call.1} parent=23 // pred_fallthru
          _
        %p185 = scmp.ne.s32.totalorder %s178, 0
        // Predicated region
        $region33: #{tpu_custom_call.1} parent=23 // pred_check
          %p186 = pneg %p185
        $region34: #{tpu_custom_call.1} parent=23 // pred_check_branch
          %188 = sbr.rel (%p186) target = $region36
        $region35: #{tpu_custom_call.1} parent=23 // pred_region
          %v189 = vld [vmem:[%s153] sm:$0xff]
          %v190 = vld [vmem:[%s153 + $0x8] sm:$0xff]
          %v191 = vmul.f32 %v189, 1.3333334
          %v192 = vmul.f32 %v190, 1.3333334
          %193 = vst [vmem:[%s172] sm:$0xff] %v191
          %194 = vst [vmem:[%s172 + $0x8] sm:$0xff] %v192
        $region36: #{tpu_custom_call.1} parent=23 // pred_fallthru
          _
        %s195 = sand.u32 %s83, 1
        %s196 = scalar_lea.sflag [#allocation6], %s195
        %s197 = sand.u32 %s83, 1
        %s198 = smul.addr %s197, 16
        %s199 = scalar_lea.vmem [#allocation7], %s198
        // Predicated region
        $region37: #{tpu_custom_call.1} parent=23 // pred_check
          %p200 = pneg %p93
        $region38: #{tpu_custom_call.1} parent=23 // pred_check_branch
          %202 = sbr.rel (%p200) target = $region40
        $region39: #{tpu_custom_call.1} parent=23 // pred_region
          %s203 = smul.u32 2, %s32
          %205 = vsyncadd %s196, 0
          %s206 = smul.addr %s31, 2
          %s207 = sadd.s32 %s203, %s206
          %s208 = smul.addr %s207, 8
          %s209 = scalar_lea.hbm %s2, %s208
          %s210 = sshll.u32 %s199, 4
          %s211 = int_to_ptr.vmem [resolvable:$true] %s210
          %s212 = sshll.u32 %s209, 4
          %s213 = int_to_ptr.hbm [resolvable:$true] %s212
          %218 = dma.vmem_to_hbm [thread:$0]  %s211, 256, %s213, %s196, 128, 128, 8
        $region40: #{tpu_custom_call.1} parent=23 // pred_fallthru
          _
      $region24: #{tpu_custom_call.1} parent=5 // pred_fallthru
        _
      %p219 = scmp.le.s32.totalorder 2, %s22
      // Predicated region
      $region41: #{tpu_custom_call.1} parent=5 // pred_check
        %p220 = pneg %p219
      $region42: #{tpu_custom_call.1} parent=5 // pred_check_branch
        %222 = sbr.rel (%p220) target = $region44
      $region43: #{tpu_custom_call.1} parent=5 // pred_region
        %s223 = ssub.s32 %s22, 2
        // Predicated region
        $region45: #{tpu_custom_call.1} parent=43 // pred_check
          %p224 = pneg %p99
        $region46: #{tpu_custom_call.1} parent=43 // pred_check_branch
          %226 = sbr.rel (%p224) target = $region48
        $region47: #{tpu_custom_call.1} parent=43 // pred_region
          %s227 = sand.u32 %s84, 1
          %s228 = scalar_lea.sflag [#allocation6], %s227
          %s229 = sand.u32 %s84, 1
          %s230 = smul.addr %s229, 16
          %s231 = scalar_lea.vmem [#allocation7], %s230
          %233 = dma.done %s228, 256
        $region48: #{tpu_custom_call.1} parent=43 // pred_fallthru
          _
      $region44: #{tpu_custom_call.1} parent=5 // pred_fallthru
        _
    $region6: #{tpu_custom_call.1} parent=1 // loop_footer
      %s26 = sadd.s32 1, %s22
    $region7: #{tpu_custom_call.1} parent=1 // loop_footer_branch
      %21 = sbr.rel target = $region3
    $region8: #{tpu_custom_call.1} parent=1 // loop_exit
      _
    %234 = vsyncpa [#allocation5], 1
    %s235 = scalar_lea.sflag [#allocation5], 1
    %236 = vsyncpa %s235, 1
    %237 = vsyncpa [#allocation6], 1
    %s238 = scalar_lea.sflag [#allocation6], 1
    %239 = vsyncpa %s238, 1

</llo_original>
